<compile_context>
chip_gen: v7x
topology: tpu7x:2x2x1
jax: 0.10.0
libtpu: 0.0.40
codegen_flags: <defaults>
</compile_context>

<pallas_src>
import functools

import jax
import jax.numpy as jnp
from jax import lax
from jax.experimental import pallas as pl
from jax.experimental.pallas import tpu as pltpu

POS_MARGIN = 0.0
NEG_MARGIN = 1.0


def _round_up(x, m):
    return ((x + m - 1) // m) * m


def _tpu_vmem_bytes():
    try:
        return int(pltpu.get_tpu_info().vmem_capacity_bytes)
    except Exception:
        return 64 * 1024 * 1024  # conservative fallback (v7x per-TensorCore VMEM)


def _max_tile_for(d, vmem_bytes):
    """Largest tile whose working set fits comfortably in VMEM (generation-aware)."""
    budget = int(vmem_bytes * 0.6)
    for t in (512, 384, 256, 128):
        # 2 bf16 [T,D] inputs x double-buffered + ~8 live [T,T] f32 temporaries + slack
        need = 4 * t * d * 2 + 8 * t * t * 4 + (2 << 20)
        if need <= budget:
            return t
    return 128


def _choose_tile(n, max_tile):
    """Tile is always a multiple of 128 (lane-dense) and a multiple of 8."""
    n128 = _round_up(max(n, 1), 128)
    if n128 <= max_tile:
        return n128
    cands = [t for t in (512, 384, 256, 128) if t <= max_tile]
    # minimal padding, tie-break on larger tile (fewer steps)
    return min(cands, key=lambda t: (_round_up(n, t), -t))


def _block_partial(x, tile):
    """[T, T] f32 -> [8, 128] partial sums using only aligned static slices + VPU adds."""
    rows = x[0:8, :]
    for r in range(1, tile // 8):
        rows = rows + x[r * 8:(r + 1) * 8, :]
    out = rows[:, 0:128]
    for k in range(1, tile // 128):
        out = out + rows[:, k * 128:(k + 1) * 128]
    return out


def _contrastive_tile_kernel(i_tab_ref, j_tab_ref,
                             emb_i_ref, emb_j_ref, lab_i_ref, lab_j_ref,
                             out_ref, *, tile, n_valid, padded):
    """One upper-triangular (row-tile i, col-tile j) step of ContrastiveLoss.

    i_tab_ref/j_tab_ref: [nsteps] int32 SMEM lookup tables (scalar prefetch)
    emb_i_ref: [T, D] bf16 row-tile embeddings (pre-normalized)
    emb_j_ref: [T, D] bf16 col-tile embeddings (pre-normalized)
    lab_i_ref: [T, 1] int32 row-tile labels
    lab_j_ref: [1, T] int32 col-tile labels (pre-transposed outside the kernel)
    out_ref:   [1, 4, 8, 128] per-step partials (pos_sum, pos_cnt, neg_sum, neg_cnt)
    """
    step = pl.program_id(0)
    i = i_tab_ref[step]
    j = j_tab_ref[step]

    # MXU gram: bf16 operands, f32 accumulation; contract D on both sides so no
    # transpose of the column tile is ever materialized.
    gram = lax.dot_general(
        emb_i_ref[...], emb_j_ref[...],
        dimension_numbers=(((1,), (1,)), ((), ())),
        preferred_element_type=jnp.float32)                        # [T, T] f32
    dist = jnp.sqrt(jnp.maximum(2.0 - 2.0 * gram, 0.0))            # pairwise L2 (unit rows)

    same = lab_i_ref[...] == lab_j_ref[...]                        # [T,1]==[1,T] -> [T,T]

    # Self-pairs only exist on diagonal tiles (i == j): scalar-gated compare of
    # cheap local [T,1]/[1,T] iotas (no full global-index tensors).
    row_loc = lax.broadcasted_iota(jnp.int32, (tile, 1), 0)
    col_loc = lax.broadcasted_iota(jnp.int32, (1, tile), 1)
    not_self = jnp.logical_or(row_loc != col_loc, i != j)
    pos_mask = jnp.logical_and(same, not_self)
    neg_mask = jnp.logical_not(same)
    if padded:  # compile-time gate: only emitted when the batch needed padding
        valid = jnp.logical_and((i * tile + row_loc) < n_valid,
                                (j * tile + col_loc) < n_valid)
        pos_mask = jnp.logical_and(pos_mask, valid)
        neg_mask = jnp.logical_and(neg_mask, valid)

    # ContrastiveLoss terms (pos_margin=0, neg_margin=1), fused with the masks.
    pos_term = jnp.where(pos_mask, dist, 0.0)
    neg_term = jnp.where(neg_mask, jnp.maximum(NEG_MARGIN - dist, 0.0), 0.0)
    pos_nz = (pos_term > 0.0).astype(jnp.float32)
    neg_nz = (neg_term > 0.0).astype(jnp.float32)

    # Symmetry weighting: off-diagonal upper-triangle tiles stand in for their
    # mirrored (lower-triangle) twin.
    w = jnp.where(i == j, 1.0, 2.0).astype(jnp.float32)

    out_ref[0, 0] = w * _block_partial(pos_term, tile)
    out_ref[0, 1] = w * _block_partial(pos_nz, tile)
    out_ref[0, 2] = w * _block_partial(neg_term, tile)
    out_ref[0, 3] = w * _block_partial(neg_nz, tile)


def contrastive_loss_pallas(all_emb, all_labels):
    """ContrastiveLoss forward on gathered embeddings/labels via a triangular tiled grid."""
    n, d = all_emb.shape

    # Hoisted prep (once, O(N*D)): f32 row L2-normalization, then bf16 cast so the
    # per-step [T,D] tile DMAs stream half the bytes.
    x = all_emb.astype(jnp.float32)
    inv = lax.rsqrt(jnp.maximum(jnp.sum(x * x, axis=-1, keepdims=True), 1e-12))
    xn = (x * inv).astype(jnp.bfloat16)
    lab = all_labels.reshape(-1).astype(jnp.int32)

    vmem = _tpu_vmem_bytes()
    tile = _choose_tile(n, _max_tile_for(d, vmem))
    n_pad = _round_up(n, tile)
    padded = n_pad > n
    if padded:
        xn = jnp.pad(xn, ((0, n_pad - n), (0, 0)))
        lab = jnp.pad(lab, (0, n_pad - n))
    lab_col = lab.reshape(n_pad, 1)
    lab_row = lab.reshape(1, n_pad)              # pre-transposed: no in-kernel transpose

    ni = n_pad // tile
    # Linearized upper-triangular tile grid; lower-triangle tiles are never DMA'd.
    pairs = [(i, j) for i in range(ni) for j in range(i, ni)]
    i_tab = jnp.asarray([p[0] for p in pairs], jnp.int32)
    j_tab = jnp.asarray([p[1] for p in pairs], jnp.int32)
    nsteps = len(pairs)

    kernel = functools.partial(_contrastive_tile_kernel,
                               tile=tile, n_valid=n, padded=padded)

    cost = pl.CostEstimate(
        flops=int(nsteps * (2 * tile * tile * d + 14 * tile * tile)),
        transcendentals=int(nsteps * tile * tile),
        bytes_accessed=int(nsteps * (2 * tile * d * 2 + 2 * tile * 4 + 4 * 8 * 128 * 4)),
    )

    partials = pl.pallas_call(
        kernel,
        out_shape=jax.ShapeDtypeStruct((nsteps, 4, 8, 128), jnp.float32),
        grid_spec=pltpu.PrefetchScalarGridSpec(
            num_scalar_prefetch=2,
            grid=(nsteps,),
            in_specs=[
                pl.BlockSpec((tile, d), lambda s, it, jt: (it[s], 0)),   # row-tile emb
                pl.BlockSpec((tile, d), lambda s, it, jt: (jt[s], 0)),   # col-tile emb
                pl.BlockSpec((tile, 1), lambda s, it, jt: (it[s], 0)),   # row-tile labels
                pl.BlockSpec((1, tile), lambda s, it, jt: (0, jt[s])),   # col-tile labels
            ],
            out_specs=pl.BlockSpec((1, 4, 8, 128), lambda s, it, jt: (s, 0, 0, 0)),
        ),
        compiler_params=pltpu.CompilerParams(
            dimension_semantics=("parallel",),   # independent per-step outputs -> megacore
            vmem_limit_bytes=int(max(32 << 20, min(vmem * 3 // 4, 100 << 20))),
        ),
        cost_estimate=cost,
    )(i_tab, j_tab, xn, xn, lab_col, lab_row)

    # Tiny JAX epilogue: global AvgNonZeroReducer (sum all partial sums AND counts
    # across every tile *before* dividing).
    sums = jnp.sum(partials, axis=(0, 2, 3))     # [4] = pos_sum, pos_cnt, neg_sum, neg_cnt
    pos_sum, pos_cnt, neg_sum, neg_cnt = sums[0], sums[1], sums[2], sums[3]
    pos = jnp.where(pos_cnt > 0.0, pos_sum / jnp.maximum(pos_cnt, 1.0), 0.0)
    neg = jnp.where(neg_cnt > 0.0, neg_sum / jnp.maximum(neg_cnt, 1.0), 0.0)
    return pos + neg


def simulated_all_gather(per_rank_tensors):
    """torch.distributed.all_gather + cat(dim=0): forward == concat over ranks."""
    return jnp.concatenate(per_rank_tensors, axis=0)


class DistributedLossWrapperPallas:
    """Pallas/JAX port of DistributedLossWrapper (efficient=False path)."""

    def __init__(self, efficient=False):
        if efficient:
            # TODO(synk): efficient=True (and CrossBatchMemory) paths need
            # lmu.remove_self_comparisons index plumbing; only efficient=False is implemented.
            raise NotImplementedError
        self.efficient = efficient

    def forward(self, emb_shards, label_shards):
        world_size = len(emb_shards)
        if world_size <= 1:
            return contrastive_loss_pallas(emb_shards[0], label_shards[0])
        all_emb = simulated_all_gather(emb_shards)
        all_labels = simulated_all_gather(label_shards)
        loss = contrastive_loss_pallas(all_emb, all_labels)
        return loss * world_size


def _reference_loss(all_emb, all_labels, world_size):
    """Pure-JAX reference mirroring the kernel math (rsqrt normalize, bf16 gram / f32 acc)."""
    x = all_emb.astype(jnp.float32)
    inv = lax.rsqrt(jnp.maximum(jnp.sum(x * x, -1, keepdims=True), 1e-12))
    xn = (x * inv).astype(jnp.bfloat16)
    gram = lax.dot_general(xn, xn, dimension_numbers=(((1,), (1,)), ((), ())),
                           preferred_element_type=jnp.float32)
    dist = jnp.sqrt(jnp.maximum(2.0 - 2.0 * gram, 0.0))
    lab = all_labels.reshape(-1, 1)
    same = lab == lab.T
    n = x.shape[0]
    eye = jnp.eye(n, dtype=bool)
    pos = jnp.where(same & ~eye, jnp.maximum(dist - POS_MARGIN, 0.0), 0.0)
    neg = jnp.where(~same, jnp.maximum(NEG_MARGIN - dist, 0.0), 0.0)

    def avg_nz(v):
        c = jnp.sum((v > 0).astype(jnp.float32))
        return jnp.where(c > 0, jnp.sum(v) / jnp.maximum(c, 1.0), 0.0)

    return (avg_nz(pos) + avg_nz(neg)) * world_size


if __name__ == "__main__":
    world_size = 2
    batch_per_rank = 8
    dim = 32
    num_classes = 4

    key = jax.random.PRNGKey(0)
    emb_shards, label_shards = [], []
    for r in range(world_size):
        key, k_e, k_l = jax.random.split(key, 3)
        emb_shards.append(jax.random.normal(k_e, (batch_per_rank, dim), jnp.float32))
        label_shards.append(
            jax.random.randint(k_l, (batch_per_rank,), 0, num_classes, jnp.int32)
        )

    wrapper = DistributedLossWrapperPallas(efficient=False)
    loss = wrapper.forward(emb_shards, label_shards)
    loss = jax.block_until_ready(loss)

    # sanity check against a pure-JAX reference with matching numerics
    ref = _reference_loss(
        jnp.concatenate(emb_shards, 0), jnp.concatenate(label_shards, 0), world_size
    )
    assert jnp.allclose(loss, ref, atol=1e-3, rtol=1e-3), (loss, ref)

    print("KERNEL_OK")
</pallas_src>

<mosaic_0001>
module attributes {stable_mosaic.version = 11 : i64} {
  func.func @_contrastive_tile_kernel(%arg0: i32, %arg1: memref<1xi32, #tpu.memory_space<smem>>, %arg2: memref<1xi32, #tpu.memory_space<smem>>, %arg3: memref<128x32xbf16, #tpu.memory_space<vmem>>, %arg4: memref<128x32xbf16, #tpu.memory_space<vmem>>, %arg5: memref<128x1xi32, #tpu.memory_space<vmem>>, %arg6: memref<1x128xi32, #tpu.memory_space<vmem>>, %arg7: memref<1x4x8x128xf32, #tpu.memory_space<vmem>>) attributes {dimension_semantics = [#tpu.dimension_semantics<parallel>], iteration_bounds = array<i64: 1>, scalar_prefetch = 2 : i64, scratch_operands = 0 : i64, tpu.core_type = #tpu.core_type<tc>, window_params = [{transform_indices = @transform_0, window_bounds = array<i64: 128, 32>}, {transform_indices = @transform_1, window_bounds = array<i64: 128, 32>}, {transform_indices = @transform_2, window_bounds = array<i64: 128, 1>}, {transform_indices = @transform_3, window_bounds = array<i64: 1, 128>}, {transform_indices = @transform_4, window_bounds = array<i64: 1, 4, 8, 128>}]} {
    %0 = arith.index_cast %arg0 : i32 to index
    %1 = memref.load %arg1[%0] : memref<1xi32, #tpu.memory_space<smem>>
    %2 = arith.index_cast %arg0 : i32 to index
    %3 = memref.load %arg2[%2] : memref<1xi32, #tpu.memory_space<smem>>
    %c0 = arith.constant 0 : index
    %c0_0 = arith.constant 0 : index
    %4 = vector.load %arg3[%c0, %c0_0] : memref<128x32xbf16, #tpu.memory_space<vmem>>, vector<128x32xbf16>
    %c0_1 = arith.constant 0 : index
    %c0_2 = arith.constant 0 : index
    %5 = vector.load %arg4[%c0_1, %c0_2] : memref<128x32xbf16, #tpu.memory_space<vmem>>, vector<128x32xbf16>
    %cst = arith.constant dense<0.000000e+00> : vector<128x128xf32>
    %6 = tpu.matmul %4, %5, %cst {dimension_numbers = #tpu.dot_dimension_numbers<[1], [1], [0], [0], [0, 0, 1, 0], [], []>} : vector<128x32xbf16>, vector<128x32xbf16>, vector<128x128xf32> -> vector<128x128xf32>
    %cst_3 = arith.constant 2.000000e+00 : f32
    %7 = vector.broadcast %cst_3 : f32 to vector<128x128xf32>
    %8 = arith.mulf %7, %6 : vector<128x128xf32>
    %cst_4 = arith.constant 2.000000e+00 : f32
    %9 = vector.broadcast %cst_4 : f32 to vector<128x128xf32>
    %10 = arith.subf %9, %8 : vector<128x128xf32>
    %cst_5 = arith.constant 0.000000e+00 : f32
    %11 = vector.broadcast %cst_5 : f32 to vector<128x128xf32>
    %12 = arith.maximumf %10, %11 : vector<128x128xf32>
    %13 = math.sqrt %12 : vector<128x128xf32>
    %c0_6 = arith.constant 0 : index
    %c0_7 = arith.constant 0 : index
    %14 = vector.load %arg5[%c0_6, %c0_7] : memref<128x1xi32, #tpu.memory_space<vmem>>, vector<128x1xi32>
    %c0_8 = arith.constant 0 : index
    %c0_9 = arith.constant 0 : index
    %15 = vector.load %arg6[%c0_8, %c0_9] : memref<1x128xi32, #tpu.memory_space<vmem>>, vector<1x128xi32>
    %16 = vector.broadcast %14 : vector<128x1xi32> to vector<128x128xi32>
    %17 = vector.broadcast %15 : vector<1x128xi32> to vector<128x128xi32>
    %18 = arith.cmpi eq, %16, %17 : vector<128x128xi32>
    %19 = tpu.iota {dimensions = array<i32: 0>} : vector<128x1xi32>
    %20 = tpu.iota {dimensions = array<i32: 1>} : vector<1x128xi32>
    %21 = vector.broadcast %19 : vector<128x1xi32> to vector<128x128xi32>
    %22 = vector.broadcast %20 : vector<1x128xi32> to vector<128x128xi32>
    %23 = arith.cmpi ne, %21, %22 : vector<128x128xi32>
    %24 = arith.cmpi ne, %1, %3 : i32
    %25 = vector.broadcast %24 : i1 to vector<128x128xi1>
    %26 = arith.ori %23, %25 : vector<128x128xi1>
    %27 = arith.andi %18, %26 : vector<128x128xi1>
    %cst_10 = arith.constant dense<true> : vector<128x128xi1>
    %28 = arith.xori %18, %cst_10 : vector<128x128xi1>
    %c128_i32 = arith.constant 128 : i32
    %29 = arith.muli %1, %c128_i32 : i32
    %30 = vector.broadcast %29 : i32 to vector<128x1xi32>
    %31 = arith.addi %30, %19 : vector<128x1xi32>
    %c16_i32 = arith.constant 16 : i32
    %32 = vector.broadcast %c16_i32 : i32 to vector<128x1xi32>
    %33 = arith.cmpi slt, %31, %32 : vector<128x1xi32>
    %c128_i32_11 = arith.constant 128 : i32
    %34 = arith.muli %3, %c128_i32_11 : i32
    %35 = vector.broadcast %34 : i32 to vector<1x128xi32>
    %36 = arith.addi %35, %20 : vector<1x128xi32>
    %c16_i32_12 = arith.constant 16 : i32
    %37 = vector.broadcast %c16_i32_12 : i32 to vector<1x128xi32>
    %38 = arith.cmpi slt, %36, %37 : vector<1x128xi32>
    %39 = vector.broadcast %33 : vector<128x1xi1> to vector<128x128xi1>
    %40 = vector.broadcast %38 : vector<1x128xi1> to vector<128x128xi1>
    %41 = arith.andi %39, %40 : vector<128x128xi1>
    %42 = arith.andi %27, %41 : vector<128x128xi1>
    %43 = arith.andi %28, %41 : vector<128x128xi1>
    %cst_13 = arith.constant 0.000000e+00 : f32
    %44 = vector.broadcast %cst_13 : f32 to vector<128x128xf32>
    %45 = arith.select %42, %13, %44 : vector<128x128xi1>, vector<128x128xf32>
    %cst_14 = arith.constant 1.000000e+00 : f32
    %46 = vector.broadcast %cst_14 : f32 to vector<128x128xf32>
    %47 = arith.subf %46, %13 : vector<128x128xf32>
    %cst_15 = arith.constant 0.000000e+00 : f32
    %48 = vector.broadcast %cst_15 : f32 to vector<128x128xf32>
    %49 = arith.maximumf %47, %48 : vector<128x128xf32>
    %cst_16 = arith.constant 0.000000e+00 : f32
    %50 = vector.broadcast %cst_16 : f32 to vector<128x128xf32>
    %51 = arith.select %43, %49, %50 : vector<128x128xi1>, vector<128x128xf32>
    %cst_17 = arith.constant 0.000000e+00 : f32
    %52 = vector.broadcast %cst_17 : f32 to vector<128x128xf32>
    %53 = arith.cmpf ogt, %45, %52 : vector<128x128xf32>
    %54 = arith.extui %53 : vector<128x128xi1> to vector<128x128xi32>
    %55 = arith.sitofp %54 : vector<128x128xi32> to vector<128x128xf32>
    %cst_18 = arith.constant 0.000000e+00 : f32
    %56 = vector.broadcast %cst_18 : f32 to vector<128x128xf32>
    %57 = arith.cmpf ogt, %51, %56 : vector<128x128xf32>
    %58 = arith.extui %57 : vector<128x128xi1> to vector<128x128xi32>
    %59 = arith.sitofp %58 : vector<128x128xi32> to vector<128x128xf32>
    %60 = arith.cmpi eq, %1, %3 : i32
    %cst_19 = arith.constant 1.000000e+00 : f32
    %cst_20 = arith.constant 2.000000e+00 : f32
    %61 = arith.select %60, %cst_19, %cst_20 : f32
    %62 = vector.extract_strided_slice %45 {offsets = [0, 0], sizes = [8, 128], strides = [1, 1]} : vector<128x128xf32> to vector<8x128xf32>
    %63 = vector.extract_strided_slice %45 {offsets = [8, 0], sizes = [8, 128], strides = [1, 1]} : vector<128x128xf32> to vector<8x128xf32>
    %64 = arith.addf %62, %63 : vector<8x128xf32>
    %65 = vector.extract_strided_slice %45 {offsets = [16, 0], sizes = [8, 128], strides = [1, 1]} : vector<128x128xf32> to vector<8x128xf32>
    %66 = arith.addf %64, %65 : vector<8x128xf32>
    %67 = vector.extract_strided_slice %45 {offsets = [24, 0], sizes = [8, 128], strides = [1, 1]} : vector<128x128xf32> to vector<8x128xf32>
    %68 = arith.addf %66, %67 : vector<8x128xf32>
    %69 = vector.extract_strided_slice %45 {offsets = [32, 0], sizes = [8, 128], strides = [1, 1]} : vector<128x128xf32> to vector<8x128xf32>
    %70 = arith.addf %68, %69 : vector<8x128xf32>
    %71 = vector.extract_strided_slice %45 {offsets = [40, 0], sizes = [8, 128], strides = [1, 1]} : vector<128x128xf32> to vector<8x128xf32>
    %72 = arith.addf %70, %71 : vector<8x128xf32>
    %73 = vector.extract_strided_slice %45 {offsets = [48, 0], sizes = [8, 128], strides = [1, 1]} : vector<128x128xf32> to vector<8x128xf32>
    %74 = arith.addf %72, %73 : vector<8x128xf32>
    %75 = vector.extract_strided_slice %45 {offsets = [56, 0], sizes = [8, 128], strides = [1, 1]} : vector<128x128xf32> to vector<8x128xf32>
    %76 = arith.addf %74, %75 : vector<8x128xf32>
    %77 = vector.extract_strided_slice %45 {offsets = [64, 0], sizes = [8, 128], strides = [1, 1]} : vector<128x128xf32> to vector<8x128xf32>
    %78 = arith.addf %76, %77 : vector<8x128xf32>
    %79 = vector.extract_strided_slice %45 {offsets = [72, 0], sizes = [8, 128], strides = [1, 1]} : vector<128x128xf32> to vector<8x128xf32>
    %80 = arith.addf %78, %79 : vector<8x128xf32>
    %81 = vector.extract_strided_slice %45 {offsets = [80, 0], sizes = [8, 128], strides = [1, 1]} : vector<128x128xf32> to vector<8x128xf32>
    %82 = arith.addf %80, %81 : vector<8x128xf32>
    %83 = vector.extract_strided_slice %45 {offsets = [88, 0], sizes = [8, 128], strides = [1, 1]} : vector<128x128xf32> to vector<8x128xf32>
    %84 = arith.addf %82, %83 : vector<8x128xf32>
    %85 = vector.extract_strided_slice %45 {offsets = [96, 0], sizes = [8, 128], strides = [1, 1]} : vector<128x128xf32> to vector<8x128xf32>
    %86 = arith.addf %84, %85 : vector<8x128xf32>
    %87 = vector.extract_strided_slice %45 {offsets = [104, 0], sizes = [8, 128], strides = [1, 1]} : vector<128x128xf32> to vector<8x128xf32>
    %88 = arith.addf %86, %87 : vector<8x128xf32>
    %89 = vector.extract_strided_slice %45 {offsets = [112, 0], sizes = [8, 128], strides = [1, 1]} : vector<128x128xf32> to vector<8x128xf32>
    %90 = arith.addf %88, %89 : vector<8x128xf32>
    %91 = vector.extract_strided_slice %45 {offsets = [120, 0], sizes = [8, 128], strides = [1, 1]} : vector<128x128xf32> to vector<8x128xf32>
    %92 = arith.addf %90, %91 : vector<8x128xf32>
    %93 = vector.broadcast %61 : f32 to vector<8x128xf32>
    %94 = arith.mulf %93, %92 : vector<8x128xf32>
    %c0_21 = arith.constant 0 : index
    %c0_22 = arith.constant 0 : index
    %c0_23 = arith.constant 0 : index
    %c0_24 = arith.constant 0 : index
    %95 = vector.load %arg7[%c0_21, %c0_22, %c0_23, %c0_24] : memref<1x4x8x128xf32, #tpu.memory_space<vmem>>, vector<1x1x8x128xf32>
    %96 = vector.shape_cast %95 : vector<1x1x8x128xf32> to vector<8x128xf32>
    %97 = vector.shape_cast %94 : vector<8x128xf32> to vector<1x1x8x128xf32>
    tpu.vector_store %arg7[%c0_21, %c0_22, %c0_23, %c0_24], %97 {strides = array<i32>} : memref<1x4x8x128xf32, #tpu.memory_space<vmem>>, vector<1x1x8x128xf32>,
    %98 = vector.extract_strided_slice %55 {offsets = [0, 0], sizes = [8, 128], strides = [1, 1]} : vector<128x128xf32> to vector<8x128xf32>
    %99 = vector.extract_strided_slice %55 {offsets = [8, 0], sizes = [8, 128], strides = [1, 1]} : vector<128x128xf32> to vector<8x128xf32>
    %100 = arith.addf %98, %99 : vector<8x128xf32>
    %101 = vector.extract_strided_slice %55 {offsets = [16, 0], sizes = [8, 128], strides = [1, 1]} : vector<128x128xf32> to vector<8x128xf32>
    %102 = arith.addf %100, %101 : vector<8x128xf32>
    %103 = vector.extract_strided_slice %55 {offsets = [24, 0], sizes = [8, 128], strides = [1, 1]} : vector<128x128xf32> to vector<8x128xf32>
    %104 = arith.addf %102, %103 : vector<8x128xf32>
    %105 = vector.extract_strided_slice %55 {offsets = [32, 0], sizes = [8, 128], strides = [1, 1]} : vector<128x128xf32> to vector<8x128xf32>
    %106 = arith.addf %104, %105 : vector<8x128xf32>
    %107 = vector.extract_strided_slice %55 {offsets = [40, 0], sizes = [8, 128], strides = [1, 1]} : vector<128x128xf32> to vector<8x128xf32>
    %108 = arith.addf %106, %107 : vector<8x128xf32>
    %109 = vector.extract_strided_slice %55 {offsets = [48, 0], sizes = [8, 128], strides = [1, 1]} : vector<128x128xf32> to vector<8x128xf32>
    %110 = arith.addf %108, %109 : vector<8x128xf32>
    %111 = vector.extract_strided_slice %55 {offsets = [56, 0], sizes = [8, 128], strides = [1, 1]} : vector<128x128xf32> to vector<8x128xf32>
    %112 = arith.addf %110, %111 : vector<8x128xf32>
    %113 = vector.extract_strided_slice %55 {offsets = [64, 0], sizes = [8, 128], strides = [1, 1]} : vector<128x128xf32> to vector<8x128xf32>
    %114 = arith.addf %112, %113 : vector<8x128xf32>
    %115 = vector.extract_strided_slice %55 {offsets = [72, 0], sizes = [8, 128], strides = [1, 1]} : vector<128x128xf32> to vector<8x128xf32>
    %116 = arith.addf %114, %115 : vector<8x128xf32>
    %117 = vector.extract_strided_slice %55 {offsets = [80, 0], sizes = [8, 128], strides = [1, 1]} : vector<128x128xf32> to vector<8x128xf32>
    %118 = arith.addf %116, %117 : vector<8x128xf32>
    %119 = vector.extract_strided_slice %55 {offsets = [88, 0], sizes = [8, 128], strides = [1, 1]} : vector<128x128xf32> to vector<8x128xf32>
    %120 = arith.addf %118, %119 : vector<8x128xf32>
    %121 = vector.extract_strided_slice %55 {offsets = [96, 0], sizes = [8, 128], strides = [1, 1]} : vector<128x128xf32> to vector<8x128xf32>
    %122 = arith.addf %120, %121 : vector<8x128xf32>
    %123 = vector.extract_strided_slice %55 {offsets = [104, 0], sizes = [8, 128], strides = [1, 1]} : vector<128x128xf32> to vector<8x128xf32>
    %124 = arith.addf %122, %123 : vector<8x128xf32>
    %125 = vector.extract_strided_slice %55 {offsets = [112, 0], sizes = [8, 128], strides = [1, 1]} : vector<128x128xf32> to vector<8x128xf32>
    %126 = arith.addf %124, %125 : vector<8x128xf32>
    %127 = vector.extract_strided_slice %55 {offsets = [120, 0], sizes = [8, 128], strides = [1, 1]} : vector<128x128xf32> to vector<8x128xf32>
    %128 = arith.addf %126, %127 : vector<8x128xf32>
    %129 = vector.broadcast %61 : f32 to vector<8x128xf32>
    %130 = arith.mulf %129, %128 : vector<8x128xf32>
    %c0_25 = arith.constant 0 : index
    %c1 = arith.constant 1 : index
    %c0_26 = arith.constant 0 : index
    %c0_27 = arith.constant 0 : index
    %131 = vector.load %arg7[%c0_25, %c1, %c0_26, %c0_27] : memref<1x4x8x128xf32, #tpu.memory_space<vmem>>, vector<1x1x8x128xf32>
    %132 = vector.shape_cast %131 : vector<1x1x8x128xf32> to vector<8x128xf32>
    %133 = vector.shape_cast %130 : vector<8x128xf32> to vector<1x1x8x128xf32>
    tpu.vector_store %arg7[%c0_25, %c1, %c0_26, %c0_27], %133 {strides = array<i32>} : memref<1x4x8x128xf32, #tpu.memory_space<vmem>>, vector<1x1x8x128xf32>,
    %134 = vector.extract_strided_slice %51 {offsets = [0, 0], sizes = [8, 128], strides = [1, 1]} : vector<128x128xf32> to vector<8x128xf32>
    %135 = vector.extract_strided_slice %51 {offsets = [8, 0], sizes = [8, 128], strides = [1, 1]} : vector<128x128xf32> to vector<8x128xf32>
    %136 = arith.addf %134, %135 : vector<8x128xf32>
    %137 = vector.extract_strided_slice %51 {offsets = [16, 0], sizes = [8, 128], strides = [1, 1]} : vector<128x128xf32> to vector<8x128xf32>
    %138 = arith.addf %136, %137 : vector<8x128xf32>
    %139 = vector.extract_strided_slice %51 {offsets = [24, 0], sizes = [8, 128], strides = [1, 1]} : vector<128x128xf32> to vector<8x128xf32>
    %140 = arith.addf %138, %139 : vector<8x128xf32>
    %141 = vector.extract_strided_slice %51 {offsets = [32, 0], sizes = [8, 128], strides = [1, 1]} : vector<128x128xf32> to vector<8x128xf32>
    %142 = arith.addf %140, %141 : vector<8x128xf32>
    %143 = vector.extract_strided_slice %51 {offsets = [40, 0], sizes = [8, 128], strides = [1, 1]} : vector<128x128xf32> to vector<8x128xf32>
    %144 = arith.addf %142, %143 : vector<8x128xf32>
    %145 = vector.extract_strided_slice %51 {offsets = [48, 0], sizes = [8, 128], strides = [1, 1]} : vector<128x128xf32> to vector<8x128xf32>
    %146 = arith.addf %144, %145 : vector<8x128xf32>
    %147 = vector.extract_strided_slice %51 {offsets = [56, 0], sizes = [8, 128], strides = [1, 1]} : vector<128x128xf32> to vector<8x128xf32>
    %148 = arith.addf %146, %147 : vector<8x128xf32>
    %149 = vector.extract_strided_slice %51 {offsets = [64, 0], sizes = [8, 128], strides = [1, 1]} : vector<128x128xf32> to vector<8x128xf32>
    %150 = arith.addf %148, %149 : vector<8x128xf32>
    %151 = vector.extract_strided_slice %51 {offsets = [72, 0], sizes = [8, 128], strides = [1, 1]} : vector<128x128xf32> to vector<8x128xf32>
    %152 = arith.addf %150, %151 : vector<8x128xf32>
    %153 = vector.extract_strided_slice %51 {offsets = [80, 0], sizes = [8, 128], strides = [1, 1]} : vector<128x128xf32> to vector<8x128xf32>
    %154 = arith.addf %152, %153 : vector<8x128xf32>
    %155 = vector.extract_strided_slice %51 {offsets = [88, 0], sizes = [8, 128], strides = [1, 1]} : vector<128x128xf32> to vector<8x128xf32>
    %156 = arith.addf %154, %155 : vector<8x128xf32>
    %157 = vector.extract_strided_slice %51 {offsets = [96, 0], sizes = [8, 128], strides = [1, 1]} : vector<128x128xf32> to vector<8x128xf32>
    %158 = arith.addf %156, %157 : vector<8x128xf32>
    %159 = vector.extract_strided_slice %51 {offsets = [104, 0], sizes = [8, 128], strides = [1, 1]} : vector<128x128xf32> to vector<8x128xf32>
    %160 = arith.addf %158, %159 : vector<8x128xf32>
    %161 = vector.extract_strided_slice %51 {offsets = [112, 0], sizes = [8, 128], strides = [1, 1]} : vector<128x128xf32> to vector<8x128xf32>
    %162 = arith.addf %160, %161 : vector<8x128xf32>
    %163 = vector.extract_strided_slice %51 {offsets = [120, 0], sizes = [8, 128], strides = [1, 1]} : vector<128x128xf32> to vector<8x128xf32>
    %164 = arith.addf %162, %163 : vector<8x128xf32>
    %165 = vector.broadcast %61 : f32 to vector<8x128xf32>
    %166 = arith.mulf %165, %164 : vector<8x128xf32>
    %c0_28 = arith.constant 0 : index
    %c2 = arith.constant 2 : index
    %c0_29 = arith.constant 0 : index
    %c0_30 = arith.constant 0 : index
    %167 = vector.load %arg7[%c0_28, %c2, %c0_29, %c0_30] : memref<1x4x8x128xf32, #tpu.memory_space<vmem>>, vector<1x1x8x128xf32>
    %168 = vector.shape_cast %167 : vector<1x1x8x128xf32> to vector<8x128xf32>
    %169 = vector.shape_cast %166 : vector<8x128xf32> to vector<1x1x8x128xf32>
    tpu.vector_store %arg7[%c0_28, %c2, %c0_29, %c0_30], %169 {strides = array<i32>} : memref<1x4x8x128xf32, #tpu.memory_space<vmem>>, vector<1x1x8x128xf32>,
    %170 = vector.extract_strided_slice %59 {offsets = [0, 0], sizes = [8, 128], strides = [1, 1]} : vector<128x128xf32> to vector<8x128xf32>
    %171 = vector.extract_strided_slice %59 {offsets = [8, 0], sizes = [8, 128], strides = [1, 1]} : vector<128x128xf32> to vector<8x128xf32>
    %172 = arith.addf %170, %171 : vector<8x128xf32>
    %173 = vector.extract_strided_slice %59 {offsets = [16, 0], sizes = [8, 128], strides = [1, 1]} : vector<128x128xf32> to vector<8x128xf32>
    %174 = arith.addf %172, %173 : vector<8x128xf32>
    %175 = vector.extract_strided_slice %59 {offsets = [24, 0], sizes = [8, 128], strides = [1, 1]} : vector<128x128xf32> to vector<8x128xf32>
    %176 = arith.addf %174, %175 : vector<8x128xf32>
    %177 = vector.extract_strided_slice %59 {offsets = [32, 0], sizes = [8, 128], strides = [1, 1]} : vector<128x128xf32> to vector<8x128xf32>
    %178 = arith.addf %176, %177 : vector<8x128xf32>
    %179 = vector.extract_strided_slice %59 {offsets = [40, 0], sizes = [8, 128], strides = [1, 1]} : vector<128x128xf32> to vector<8x128xf32>
    %180 = arith.addf %178, %179 : vector<8x128xf32>
    %181 = vector.extract_strided_slice %59 {offsets = [48, 0], sizes = [8, 128], strides = [1, 1]} : vector<128x128xf32> to vector<8x128xf32>
    %182 = arith.addf %180, %181 : vector<8x128xf32>
    %183 = vector.extract_strided_slice %59 {offsets = [56, 0], sizes = [8, 128], strides = [1, 1]} : vector<128x128xf32> to vector<8x128xf32>
    %184 = arith.addf %182, %183 : vector<8x128xf32>
    %185 = vector.extract_strided_slice %59 {offsets = [64, 0], sizes = [8, 128], strides = [1, 1]} : vector<128x128xf32> to vector<8x128xf32>
    %186 = arith.addf %184, %185 : vector<8x128xf32>
    %187 = vector.extract_strided_slice %59 {offsets = [72, 0], sizes = [8, 128], strides = [1, 1]} : vector<128x128xf32> to vector<8x128xf32>
    %188 = arith.addf %186, %187 : vector<8x128xf32>
    %189 = vector.extract_strided_slice %59 {offsets = [80, 0], sizes = [8, 128], strides = [1, 1]} : vector<128x128xf32> to vector<8x128xf32>
    %190 = arith.addf %188, %189 : vector<8x128xf32>
    %191 = vector.extract_strided_slice %59 {offsets = [88, 0], sizes = [8, 128], strides = [1, 1]} : vector<128x128xf32> to vector<8x128xf32>
    %192 = arith.addf %190, %191 : vector<8x128xf32>
    %193 = vector.extract_strided_slice %59 {offsets = [96, 0], sizes = [8, 128], strides = [1, 1]} : vector<128x128xf32> to vector<8x128xf32>
    %194 = arith.addf %192, %193 : vector<8x128xf32>
    %195 = vector.extract_strided_slice %59 {offsets = [104, 0], sizes = [8, 128], strides = [1, 1]} : vector<128x128xf32> to vector<8x128xf32>
    %196 = arith.addf %194, %195 : vector<8x128xf32>
    %197 = vector.extract_strided_slice %59 {offsets = [112, 0], sizes = [8, 128], strides = [1, 1]} : vector<128x128xf32> to vector<8x128xf32>
    %198 = arith.addf %196, %197 : vector<8x128xf32>
    %199 = vector.extract_strided_slice %59 {offsets = [120, 0], sizes = [8, 128], strides = [1, 1]} : vector<128x128xf32> to vector<8x128xf32>
    %200 = arith.addf %198, %199 : vector<8x128xf32>
    %201 = vector.broadcast %61 : f32 to vector<8x128xf32>
    %202 = arith.mulf %201, %200 : vector<8x128xf32>
    %c0_31 = arith.constant 0 : index
    %c3 = arith.constant 3 : index
    %c0_32 = arith.constant 0 : index
    %c0_33 = arith.constant 0 : index
    %203 = vector.load %arg7[%c0_31, %c3, %c0_32, %c0_33] : memref<1x4x8x128xf32, #tpu.memory_space<vmem>>, vector<1x1x8x128xf32>
    %204 = vector.shape_cast %203 : vector<1x1x8x128xf32> to vector<8x128xf32>
    %205 = vector.shape_cast %202 : vector<8x128xf32> to vector<1x1x8x128xf32>
    tpu.vector_store %arg7[%c0_31, %c3, %c0_32, %c0_33], %205 {strides = array<i32>} : memref<1x4x8x128xf32, #tpu.memory_space<vmem>>, vector<1x1x8x128xf32>,
    return
  }
  func.func @transform_0(%arg0: i32, %arg1: memref<1xi32, #tpu.memory_space<smem>>, %arg2: memref<1xi32, #tpu.memory_space<smem>>) -> (i32, i32) {
    %0 = arith.index_cast %arg0 : i32 to index
    %1 = memref.load %arg1[%0] : memref<1xi32, #tpu.memory_space<smem>>
    %c0_i32 = arith.constant 0 : i32
    %c0_i32_0 = arith.constant 0 : i32
    return %1, %c0_i32 : i32, i32
  }
  func.func @transform_1(%arg0: i32, %arg1: memref<1xi32, #tpu.memory_space<smem>>, %arg2: memref<1xi32, #tpu.memory_space<smem>>) -> (i32, i32) {
    %0 = arith.index_cast %arg0 : i32 to index
    %1 = memref.load %arg2[%0] : memref<1xi32, #tpu.memory_space<smem>>
    %c0_i32 = arith.constant 0 : i32
    %c0_i32_0 = arith.constant 0 : i32
    return %1, %c0_i32 : i32, i32
  }
  func.func @transform_2(%arg0: i32, %arg1: memref<1xi32, #tpu.memory_space<smem>>, %arg2: memref<1xi32, #tpu.memory_space<smem>>) -> (i32, i32) {
    %0 = arith.index_cast %arg0 : i32 to index
    %1 = memref.load %arg1[%0] : memref<1xi32, #tpu.memory_space<smem>>
    %c0_i32 = arith.constant 0 : i32
    %c0_i32_0 = arith.constant 0 : i32
    return %1, %c0_i32 : i32, i32
  }
  func.func @transform_3(%arg0: i32, %arg1: memref<1xi32, #tpu.memory_space<smem>>, %arg2: memref<1xi32, #tpu.memory_space<smem>>) -> (i32, i32) {
    %0 = arith.index_cast %arg0 : i32 to index
    %1 = memref.load %arg2[%0] : memref<1xi32, #tpu.memory_space<smem>>
    %c0_i32 = arith.constant 0 : i32
    %c0_i32_0 = arith.constant 0 : i32
    return %c0_i32, %1 : i32, i32
  }
  func.func @transform_4(%arg0: i32, %arg1: memref<1xi32, #tpu.memory_space<smem>>, %arg2: memref<1xi32, #tpu.memory_space<smem>>) -> (i32, i32, i32, i32) {
    %c0_i32 = arith.constant 0 : i32
    %c0_i32_0 = arith.constant 0 : i32
    %c0_i32_1 = arith.constant 0 : i32
    %c0_i32_2 = arith.constant 0 : i32
    return %arg0, %c0_i32, %c0_i32_0, %c0_i32_1 : i32, i32, i32, i32
  }
}

</mosaic_0001>

<llo_original>
// kernel: tpu_custom_call.1
$region0: #{tpu_custom_call.1}
  #allocation0 [shape = 'u32[]', space=smem, size = 0x4, offset = 0x4, fixed_abs, tag = 'smem constant byte address 0x4 - core index']
  #allocation1 [shape = 'u32[144,128]{1,0:T(1,128)}', space=vmem, size = 0x12000, scoped, tag = 'internal scratch']
  #allocation2 [shape = 's32[1]{0}', space=sflag, size = 0x4, scoped, tag = 'scoped memory for tpu_custom_call.1']
  #allocation3 [shape = 's32[1]{0:T(128)S(6)}', space=smem, size = 0x200, scoped, tag = 'prefetched SMEM operand 0']
  #allocation4 [shape = 's32[1]{0:T(128)S(6)}', space=smem, size = 0x200, scoped, tag = 'prefetched SMEM operand 1']
  %s0 = inlined_call_operand.<no memory space> [shape: s32[1], index: 0, kind: input, shape index: {}]
  %s1 = inlined_call_operand.<no memory space> [shape: s32[1], index: 1, kind: input, shape index: {}]
  %s2 = inlined_call_operand.vmem [shape: bf16[128,32], index: 2, kind: input, shape index: {}]
  %s3 = inlined_call_operand.vmem [shape: bf16[128,32], index: 3, kind: input, shape index: {}]
  %s4 = inlined_call_operand.vmem [shape: s32[128,1], index: 4, kind: input, shape index: {}]
  %s5 = inlined_call_operand.vmem [shape: s32[1,128], index: 5, kind: input, shape index: {}]
  %s6 = inlined_call_operand.hbm [shape: f32[1,4,8,128], index: 6, kind: output, shape index: {}]
  %s7 = sld [smem:[#allocation0]]
  $region26: #{tpu_custom_call.1} parent=0
    _
  %s9 = ssub.s32 1, %s7
  %s10 = scalar_select 0, %s9, %s7
  %11 = sst [smem:[#allocation3]] %s0
  %12 = sst [smem:[#allocation4]] %s1
  $region1: #{tpu_custom_call.1} parent=0
    #allocation5 [shape = 'u8[16384]{0}', space=vmem, size = 0x4000, scoped, tag = 'output window, operand 0, single buffered']
    #allocation6 [shape = 's32[1]{0}', space=sflag, size = 0x4, scoped, tag = 'scoped memory for tpu_custom_call.1']
    %13 = vsyncpa [#allocation6], 0
    // Predicated region
    $region2: #{tpu_custom_call.1} parent=1 // pred_check
      _
    $region3: #{tpu_custom_call.1} parent=1 // pred_check_branch
      %15 = sbr.rel (0) target = $region5
    $region4: #{tpu_custom_call.1} parent=1 // pred_region
      %s16 = sld [smem:[#allocation3]]
      %s17 = smul.u32 16, %s16
      %p18 = scmp.lt.s32.totalorder %s17, 15
      %s19 = scalar_select %p18, %s17, 15
      %s20 = smul.addr %s19, 4
      %s21 = scalar_lea.vmem %s2, %s20
      %s22 = sld [smem:[#allocation3]]
      %s23 = smul.u32 16, %s22
    $region5: #{tpu_custom_call.1} parent=1 // pred_fallthru
      _
    // Predicated region
    $region6: #{tpu_custom_call.1} parent=1 // pred_check
      _
    $region7: #{tpu_custom_call.1} parent=1 // pred_check_branch
      %25 = sbr.rel (0) target = $region9
    $region8: #{tpu_custom_call.1} parent=1 // pred_region
      %s26 = sld [smem:[#allocation4]]
      %s27 = smul.u32 16, %s26
      %p28 = scmp.lt.s32.totalorder %s27, 15
      %s29 = scalar_select %p28, %s27, 15
      %s30 = smul.addr %s29, 4
      %s31 = scalar_lea.vmem %s3, %s30
      %s32 = sld [smem:[#allocation4]]
      %s33 = smul.u32 16, %s32
    $region9: #{tpu_custom_call.1} parent=1 // pred_fallthru
      _
    // Predicated region
    $region10: #{tpu_custom_call.1} parent=1 // pred_check
      _
    $region11: #{tpu_custom_call.1} parent=1 // pred_check_branch
      %35 = sbr.rel (0) target = $region13
    $region12: #{tpu_custom_call.1} parent=1 // pred_region
      %s36 = sld [smem:[#allocation3]]
      %s37 = smul.u32 16, %s36
      %p38 = scmp.lt.s32.totalorder %s37, 15
      %s39 = scalar_select %p38, %s37, 15
      %s40 = smul.addr %s39, 8
      %s41 = scalar_lea.vmem %s4, %s40
      %s42 = sld [smem:[#allocation3]]
      %s43 = smul.u32 16, %s42
    $region13: #{tpu_custom_call.1} parent=1 // pred_fallthru
      _
    // Predicated region
    $region14: #{tpu_custom_call.1} parent=1 // pred_check
      _
    $region15: #{tpu_custom_call.1} parent=1 // pred_check_branch
      %45 = sbr.rel (0) target = $region17
    $region16: #{tpu_custom_call.1} parent=1 // pred_region
      %s46 = sld [smem:[#allocation4]]
      %p47 = scmp.lt.s32.totalorder %s46, 0
      %s48 = scalar_select %p47, %s46, 0
      %s49 = scalar_lea.vmem %s5, %s48
      %s50 = sld [smem:[#allocation4]]
    $region17: #{tpu_custom_call.1} parent=1 // pred_fallthru
      _
    %s51 = sld [smem:[#allocation3]]
    %s52 = smul.u32 16, %s51
    %p53 = scmp.lt.s32.totalorder %s52, 15
    %s54 = scalar_select %p53, %s52, 15
    %s55 = smul.addr %s54, 4
    %s56 = scalar_lea.vmem %s2, %s55
    %s57 = sld [smem:[#allocation4]]
    %s58 = smul.u32 16, %s57
    %p59 = scmp.lt.s32.totalorder %s58, 15
    %s60 = scalar_select %p59, %s58, 15
    %s61 = smul.addr %s60, 4
    %s62 = scalar_lea.vmem %s3, %s61
    %s63 = sld [smem:[#allocation3]]
    %s64 = smul.u32 16, %s63
    %p65 = scmp.lt.s32.totalorder %s64, 15
    %s66 = scalar_select %p65, %s64, 15
    %s67 = smul.addr %s66, 8
    %s68 = scalar_lea.vmem %s4, %s67
    %s69 = sld [smem:[#allocation4]]
    %p70 = scmp.lt.s32.totalorder %s69, 0
    %s71 = scalar_select %p70, %s69, 0
    %s72 = scalar_lea.vmem %s5, %s71
    %s73 = sld [smem:[#allocation3]]
    %s74 = smul.u32 16, %s73
    %p75 = scmp.lt.s32.totalorder %s74, 15
    %s76 = scalar_select %p75, %s74, 15
    %s77 = smul.addr %s76, 4
    %s78 = scalar_lea.vmem %s2, %s77
    %s79 = sld [smem:[#allocation3]]
    %s80 = smul.u32 16, %s79
    %s81 = sld [smem:[#allocation4]]
    %s82 = smul.u32 16, %s81
    %p83 = scmp.lt.s32.totalorder %s82, 15
    %s84 = scalar_select %p83, %s82, 15
    %s85 = smul.addr %s84, 4
    %s86 = scalar_lea.vmem %s3, %s85
    %s87 = sld [smem:[#allocation4]]
    %s88 = smul.u32 16, %s87
    %s89 = sld [smem:[#allocation3]]
    %s90 = smul.u32 16, %s89
    %p91 = scmp.lt.s32.totalorder %s90, 15
    %s92 = scalar_select %p91, %s90, 15
    %s93 = smul.addr %s92, 8
    %s94 = scalar_lea.vmem %s4, %s93
    %s95 = sld [smem:[#allocation3]]
    %s96 = smul.u32 16, %s95
    %s97 = sld [smem:[#allocation4]]
    %p98 = scmp.lt.s32.totalorder %s97, 0
    %s99 = scalar_select %p98, %s97, 0
    %s100 = scalar_lea.vmem %s5, %s99
    %s101 = sld [smem:[#allocation4]]
    %s103 = sld [smem:[#allocation3]]
    %s104 = sld [smem:[#allocation4]]
    %v105 = vld [vmem:[%s78] sm:$0xf]
    %v106 = vld [vmem:[%s78 + $0x4] sm:$0xf]
    %v107 = vld [vmem:[%s78 + $0x8] sm:$0xf]
    %v108 = vld [vmem:[%s78 + $0xc] sm:$0xf]
    %v109 = vld [vmem:[%s78 + $0x10] sm:$0xf]
    %v110 = vld [vmem:[%s78 + $0x14] sm:$0xf]
    %v111 = vld [vmem:[%s78 + $0x18] sm:$0xf]
    %v112 = vld [vmem:[%s78 + $0x1c] sm:$0xf]
    %v113 = vld [vmem:[%s78 + $0x20] sm:$0xf]
    %v114 = vld [vmem:[%s78 + $0x24] sm:$0xf]
    %v115 = vld [vmem:[%s78 + $0x28] sm:$0xf]
    %v116 = vld [vmem:[%s78 + $0x2c] sm:$0xf]
    %v117 = vld [vmem:[%s78 + $0x30] sm:$0xf]
    %v118 = vld [vmem:[%s78 + $0x34] sm:$0xf]
    %v119 = vld [vmem:[%s78 + $0x38] sm:$0xf]
    %v120 = vld [vmem:[%s78 + $0x3c] sm:$0xf]
    %v121 = vld [vmem:[%s86] sm:$0xf]
    %v122 = vld [vmem:[%s86 + $0x4] sm:$0xf]
    %v123 = vld [vmem:[%s86 + $0x8] sm:$0xf]
    %v124 = vld [vmem:[%s86 + $0xc] sm:$0xf]
    %v125 = vld [vmem:[%s86 + $0x10] sm:$0xf]
    %v126 = vld [vmem:[%s86 + $0x14] sm:$0xf]
    %v127 = vld [vmem:[%s86 + $0x18] sm:$0xf]
    %v128 = vld [vmem:[%s86 + $0x1c] sm:$0xf]
    %v129 = vld [vmem:[%s86 + $0x20] sm:$0xf]
    %v130 = vld [vmem:[%s86 + $0x24] sm:$0xf]
    %v131 = vld [vmem:[%s86 + $0x28] sm:$0xf]
    %v132 = vld [vmem:[%s86 + $0x2c] sm:$0xf]
    %v133 = vld [vmem:[%s86 + $0x30] sm:$0xf]
    %v134 = vld [vmem:[%s86 + $0x34] sm:$0xf]
    %v135 = vld [vmem:[%s86 + $0x38] sm:$0xf]
    %v136 = vld [vmem:[%s86 + $0x3c] sm:$0xf]
    %v153 = vunpack.c.l.b16 %v105
    %v154 = vunpack.c.l.b16 %v106
    %v155 = vunpack.c.l.b16 %v107
    %v156 = vunpack.c.l.b16 %v108
    %v157 = vunpack.c.l.b16 %v109
    %v158 = vunpack.c.l.b16 %v110
    %v159 = vunpack.c.l.b16 %v111
    %v160 = vunpack.c.l.b16 %v112
    %v161 = vunpack.c.l.b16 %v113
    %v162 = vunpack.c.l.b16 %v114
    %v163 = vunpack.c.l.b16 %v115
    %v164 = vunpack.c.l.b16 %v116
    %v165 = vunpack.c.l.b16 %v117
    %v166 = vunpack.c.l.b16 %v118
    %v167 = vunpack.c.l.b16 %v119
    %v168 = vunpack.c.l.b16 %v120
    %v169 = vpack.c.b16 %v154, %v153
    %v170 = vpack.c.b16 %v156, %v155
    %v171 = vpack.c.b16 %v158, %v157
    %v172 = vpack.c.b16 %v160, %v159
    %v173 = vpack.c.b16 %v162, %v161
    %v174 = vpack.c.b16 %v164, %v163
    %v175 = vpack.c.b16 %v166, %v165
    %v176 = vpack.c.b16 %v168, %v167
    %v193 = vunpack.c.l.b16 %v121
    %v194 = vunpack.c.l.b16 %v122
    %v195 = vunpack.c.l.b16 %v123
    %v196 = vunpack.c.l.b16 %v124
    %v197 = vunpack.c.l.b16 %v125
    %v198 = vunpack.c.l.b16 %v126
    %v199 = vunpack.c.l.b16 %v127
    %v200 = vunpack.c.l.b16 %v128
    %v201 = vunpack.c.l.b16 %v129
    %v202 = vunpack.c.l.b16 %v130
    %v203 = vunpack.c.l.b16 %v131
    %v204 = vunpack.c.l.b16 %v132
    %v205 = vunpack.c.l.b16 %v133
    %v206 = vunpack.c.l.b16 %v134
    %v207 = vunpack.c.l.b16 %v135
    %v208 = vunpack.c.l.b16 %v136
    %v209 = vpack.c.b16 %v194, %v193
    %v210 = vpack.c.b16 %v196, %v195
    %v211 = vpack.c.b16 %v198, %v197
    %v212 = vpack.c.b16 %v200, %v199
    %v213 = vpack.c.b16 %v202, %v201
    %v214 = vpack.c.b16 %v204, %v203
    %v215 = vpack.c.b16 %v206, %v205
    %v216 = vpack.c.b16 %v208, %v207
    %vm217 = vcmask 261120
    %v219 = vsel %vm217, %v169, 0
    %v222 = vsel %vm217, %v170, 0
    %v225 = vsel %vm217, %v171, 0
    %v228 = vsel %vm217, %v172, 0
    %v231 = vsel %vm217, %v173, 0
    %v234 = vsel %vm217, %v174, 0
    %v237 = vsel %vm217, %v175, 0
    %v240 = vsel %vm217, %v176, 0
    %v243 = vsel %vm217, %v209, 0
    %v246 = vsel %vm217, %v210, 0
    %v249 = vsel %vm217, %v211, 0
    %v252 = vsel %vm217, %v212, 0
    %v255 = vsel %vm217, %v213, 0
    %v258 = vsel %vm217, %v214, 0
    %v261 = vsel %vm217, %v215, 0
    %v264 = vsel %vm217, %v216, 0
    %266 = vmatprep.subr.bf16.mxu0 0
    %267 = vmatpush1.bf16.xpose.msra.mxu0 %v243
    %268 = vmatprep.subr.bf16.mxu0 0
    %269 = vmatpush1.bf16.xpose.msra.mxu0 %v246
    %270 = vmatprep.subr.bf16.mxu0 0
    %271 = vmatpush1.bf16.xpose.msra.mxu0 %v249
    %272 = vmatprep.subr.bf16.mxu0 0
    %273 = vmatpush1.bf16.xpose.msra.mxu0 %v252
    %274 = vmatprep.subr.bf16.mxu0 0
    %275 = vmatpush1.bf16.xpose.msra.mxu0 %v255
    %276 = vmatprep.subr.bf16.mxu0 0
    %277 = vmatpush1.bf16.xpose.msra.mxu0 %v258
    %278 = vmatprep.subr.bf16.mxu0 0
    %279 = vmatpush1.bf16.xpose.msra.mxu0 %v261
    %280 = vmatprep.subr.bf16.mxu0 0
    %281 = vmatpush1.bf16.xpose.msra.mxu0 %v264
    %282 = vmatprep.subr.bf16.mxu0 0
    %283 = vmatpush1.bf16.xpose.msra.mxu0 0
    %284 = vmatprep.subr.bf16.mxu0 0
    %285 = vmatpush1.bf16.xpose.msra.mxu0 0
    %286 = vmatprep.subr.bf16.mxu0 0
    %287 = vmatpush1.bf16.xpose.msra.mxu0 0
    %288 = vmatprep.subr.bf16.mxu0 0
    %289 = vmatpush1.bf16.xpose.msra.mxu0 0
    %290 = vmatprep.subr.bf16.mxu0 0
    %291 = vmatpush1.bf16.xpose.msra.mxu0 0
    %292 = vmatprep.subr.bf16.mxu0 0
    %293 = vmatpush1.bf16.xpose.msra.mxu0 0
    %294 = vmatprep.subr.bf16.mxu0 0
    %295 = vmatpush1.bf16.xpose.msra.mxu0 0
    %296 = vmatprep.subr.bf16.mxu0 0
    %297 = vmatpush1.bf16.xpose.msra.mxu0 0
    %298 = vmatprep.mubr.bf16.mxu0 0
    %299 = vmatmul.mubr.bf16.gmra.mrb[0].mxu0 %v219
    %v300 = vpop.f32.mrb[0].mxu0
    %v301 = vadd.f32 0.0, %v300
    %v302 = vpop.f32.mrb[0].mxu0
    %v303 = vpop.f32.mrb[0].mxu0
    %v304 = vadd.f32 0.0, %v303
    %v305 = vpop.f32.mrb[0].mxu0
    %306 = vmatprep.mubr.bf16.mxu0 0
    %307 = vmatmul.mubr.bf16.gmra.mrb[0].mxu0 %v222
    %v308 = vpop.f32.mrb[0].mxu0
    %v309 = vadd.f32 0.0, %v308
    %v310 = vpop.f32.mrb[0].mxu0
    %v311 = vpop.f32.mrb[0].mxu0
    %v312 = vadd.f32 0.0, %v311
    %v313 = vpop.f32.mrb[0].mxu0
    %314 = vmatprep.mubr.bf16.mxu0 0
    %315 = vmatmul.mubr.bf16.gmra.mrb[0].mxu0 %v225
    %v316 = vpop.f32.mrb[0].mxu0
    %v317 = vadd.f32 0.0, %v316
    %v318 = vpop.f32.mrb[0].mxu0
    %v319 = vpop.f32.mrb[0].mxu0
    %v320 = vadd.f32 0.0, %v319
    %v321 = vpop.f32.mrb[0].mxu0
    %322 = vmatprep.mubr.bf16.mxu0 0
    %323 = vmatmul.mubr.bf16.gmra.mrb[0].mxu0 %v228
    %v324 = vpop.f32.mrb[0].mxu0
    %v325 = vadd.f32 0.0, %v324
    %v326 = vpop.f32.mrb[0].mxu0
    %v327 = vpop.f32.mrb[0].mxu0
    %v328 = vadd.f32 0.0, %v327
    %v329 = vpop.f32.mrb[0].mxu0
    %330 = vmatprep.mubr.bf16.mxu0 0
    %331 = vmatmul.mubr.bf16.gmra.mrb[0].mxu0 %v231
    %v332 = vpop.f32.mrb[0].mxu0
    %v333 = vadd.f32 0.0, %v332
    %v334 = vpop.f32.mrb[0].mxu0
    %v335 = vpop.f32.mrb[0].mxu0
    %v336 = vadd.f32 0.0, %v335
    %v337 = vpop.f32.mrb[0].mxu0
    %338 = vmatprep.mubr.bf16.mxu0 0
    %339 = vmatmul.mubr.bf16.gmra.mrb[0].mxu0 %v234
    %v340 = vpop.f32.mrb[0].mxu0
    %v341 = vadd.f32 0.0, %v340
    %v342 = vpop.f32.mrb[0].mxu0
    %v343 = vpop.f32.mrb[0].mxu0
    %v344 = vadd.f32 0.0, %v343
    %v345 = vpop.f32.mrb[0].mxu0
    %346 = vmatprep.mubr.bf16.mxu0 0
    %347 = vmatmul.mubr.bf16.gmra.mrb[0].mxu0 %v237
    %v348 = vpop.f32.mrb[0].mxu0
    %v349 = vadd.f32 0.0, %v348
    %v350 = vpop.f32.mrb[0].mxu0
    %v351 = vpop.f32.mrb[0].mxu0
    %v352 = vadd.f32 0.0, %v351
    %v353 = vpop.f32.mrb[0].mxu0
    %354 = vmatprep.mubr.bf16.mxu0 0
    %355 = vmatmul.mubr.bf16.gmra.mrb[0].mxu0 %v240
    %v356 = vpop.f32.mrb[0].mxu0
    %v357 = vadd.f32 0.0, %v356
    %v358 = vpop.f32.mrb[0].mxu0
    %v359 = vpop.f32.mrb[0].mxu0
    %v360 = vadd.f32 0.0, %v359
    %v361 = vpop.f32.mrb[0].mxu0
    %362 = vdwg.mxu0
    %v363 = vmul.f32 %v301, 2.0
    %v364 = vmul.f32 %v304, 2.0
    %v365 = vmul.f32 %v309, 2.0
    %v366 = vmul.f32 %v312, 2.0
    %v367 = vmul.f32 %v317, 2.0
    %v368 = vmul.f32 %v320, 2.0
    %v369 = vmul.f32 %v325, 2.0
    %v370 = vmul.f32 %v328, 2.0
    %v371 = vmul.f32 %v333, 2.0
    %v372 = vmul.f32 %v336, 2.0
    %v373 = vmul.f32 %v341, 2.0
    %v374 = vmul.f32 %v344, 2.0
    %v375 = vmul.f32 %v349, 2.0
    %v376 = vmul.f32 %v352, 2.0
    %v377 = vmul.f32 %v357, 2.0
    %v378 = vmul.f32 %v360, 2.0
    %v379 = vsub.f32 2.0, %v363
    %v380 = vsub.f32 2.0, %v364
    %v381 = vsub.f32 2.0, %v365
    %v382 = vsub.f32 2.0, %v366
    %v383 = vsub.f32 2.0, %v367
    %v384 = vsub.f32 2.0, %v368
    %v385 = vsub.f32 2.0, %v369
    %v386 = vsub.f32 2.0, %v370
    %v387 = vsub.f32 2.0, %v371
    %v388 = vsub.f32 2.0, %v372
    %v389 = vsub.f32 2.0, %v373
    %v390 = vsub.f32 2.0, %v374
    %v391 = vsub.f32 2.0, %v375
    %v392 = vsub.f32 2.0, %v376
    %v393 = vsub.f32 2.0, %v377
    %v394 = vsub.f32 2.0, %v378
    %v395 = vmax.f32 %v379, 0.0
    %v396 = vmax.f32 %v380, 0.0
    %v397 = vmax.f32 %v381, 0.0
    %v398 = vmax.f32 %v382, 0.0
    %v399 = vmax.f32 %v383, 0.0
    %v400 = vmax.f32 %v384, 0.0
    %v401 = vmax.f32 %v385, 0.0
    %v402 = vmax.f32 %v386, 0.0
    %v403 = vmax.f32 %v387, 0.0
    %v404 = vmax.f32 %v388, 0.0
    %v405 = vmax.f32 %v389, 0.0
    %v406 = vmax.f32 %v390, 0.0
    %v407 = vmax.f32 %v391, 0.0
    %v408 = vmax.f32 %v392, 0.0
    %v409 = vmax.f32 %v393, 0.0
    %v410 = vmax.f32 %v394, 0.0
    %v411 = vrsqrt.pop %v395
    %v412 = vmul.f32 %v395, %v411
    %vm413 = vcmp.eq.f32.partialorder %v395, inf
    %v414 = vsel %vm413, %v395, %v412
    %vm415 = vcmp.eq.f32.partialorder %v395, 0.0
    %v416 = vand.u32 %v395, 2147483648
    %v417 = vsel %vm415, %v416, %v414
    %v418 = vrsqrt.pop %v396
    %v419 = vmul.f32 %v396, %v418
    %vm420 = vcmp.eq.f32.partialorder %v396, inf
    %v421 = vsel %vm420, %v396, %v419
    %vm422 = vcmp.eq.f32.partialorder %v396, 0.0
    %v423 = vand.u32 %v396, 2147483648
    %v424 = vsel %vm422, %v423, %v421
    %v425 = vrsqrt.pop %v397
    %v426 = vmul.f32 %v397, %v425
    %vm427 = vcmp.eq.f32.partialorder %v397, inf
    %v428 = vsel %vm427, %v397, %v426
    %vm429 = vcmp.eq.f32.partialorder %v397, 0.0
    %v430 = vand.u32 %v397, 2147483648
    %v431 = vsel %vm429, %v430, %v428
    %v432 = vrsqrt.pop %v398
    %v433 = vmul.f32 %v398, %v432
    %vm434 = vcmp.eq.f32.partialorder %v398, inf
    %v435 = vsel %vm434, %v398, %v433
    %vm436 = vcmp.eq.f32.partialorder %v398, 0.0
    %v437 = vand.u32 %v398, 2147483648
    %v438 = vsel %vm436, %v437, %v435
    %v439 = vrsqrt.pop %v399
    %v440 = vmul.f32 %v399, %v439
    %vm441 = vcmp.eq.f32.partialorder %v399, inf
    %v442 = vsel %vm441, %v399, %v440
    %vm443 = vcmp.eq.f32.partialorder %v399, 0.0
    %v444 = vand.u32 %v399, 2147483648
    %v445 = vsel %vm443, %v444, %v442
    %v446 = vrsqrt.pop %v400
    %v447 = vmul.f32 %v400, %v446
    %vm448 = vcmp.eq.f32.partialorder %v400, inf
    %v449 = vsel %vm448, %v400, %v447
    %vm450 = vcmp.eq.f32.partialorder %v400, 0.0
    %v451 = vand.u32 %v400, 2147483648
    %v452 = vsel %vm450, %v451, %v449
    %v453 = vrsqrt.pop %v401
    %v454 = vmul.f32 %v401, %v453
    %vm455 = vcmp.eq.f32.partialorder %v401, inf
    %v456 = vsel %vm455, %v401, %v454
    %vm457 = vcmp.eq.f32.partialorder %v401, 0.0
    %v458 = vand.u32 %v401, 2147483648
    %v459 = vsel %vm457, %v458, %v456
    %v460 = vrsqrt.pop %v402
    %v461 = vmul.f32 %v402, %v460
    %vm462 = vcmp.eq.f32.partialorder %v402, inf
    %v463 = vsel %vm462, %v402, %v461
    %vm464 = vcmp.eq.f32.partialorder %v402, 0.0
    %v465 = vand.u32 %v402, 2147483648
    %v466 = vsel %vm464, %v465, %v463
    %v467 = vrsqrt.pop %v403
    %v468 = vmul.f32 %v403, %v467
    %vm469 = vcmp.eq.f32.partialorder %v403, inf
    %v470 = vsel %vm469, %v403, %v468
    %vm471 = vcmp.eq.f32.partialorder %v403, 0.0
    %v472 = vand.u32 %v403, 2147483648
    %v473 = vsel %vm471, %v472, %v470
    %v474 = vrsqrt.pop %v404
    %v475 = vmul.f32 %v404, %v474
    %vm476 = vcmp.eq.f32.partialorder %v404, inf
    %v477 = vsel %vm476, %v404, %v475
    %vm478 = vcmp.eq.f32.partialorder %v404, 0.0
    %v479 = vand.u32 %v404, 2147483648
    %v480 = vsel %vm478, %v479, %v477
    %v481 = vrsqrt.pop %v405
    %v482 = vmul.f32 %v405, %v481
    %vm483 = vcmp.eq.f32.partialorder %v405, inf
    %v484 = vsel %vm483, %v405, %v482
    %vm485 = vcmp.eq.f32.partialorder %v405, 0.0
    %v486 = vand.u32 %v405, 2147483648
    %v487 = vsel %vm485, %v486, %v484
    %v488 = vrsqrt.pop %v406
    %v489 = vmul.f32 %v406, %v488
    %vm490 = vcmp.eq.f32.partialorder %v406, inf
    %v491 = vsel %vm490, %v406, %v489
    %vm492 = vcmp.eq.f32.partialorder %v406, 0.0
    %v493 = vand.u32 %v406, 2147483648
    %v494 = vsel %vm492, %v493, %v491
    %v495 = vrsqrt.pop %v407
    %v496 = vmul.f32 %v407, %v495
    %vm497 = vcmp.eq.f32.partialorder %v407, inf
    %v498 = vsel %vm497, %v407, %v496
    %vm499 = vcmp.eq.f32.partialorder %v407, 0.0
    %v500 = vand.u32 %v407, 2147483648
    %v501 = vsel %vm499, %v500, %v498
    %v502 = vrsqrt.pop %v408
    %v503 = vmul.f32 %v408, %v502
    %vm504 = vcmp.eq.f32.partialorder %v408, inf
    %v505 = vsel %vm504, %v408, %v503
    %vm506 = vcmp.eq.f32.partialorder %v408, 0.0
    %v507 = vand.u32 %v408, 2147483648
    %v508 = vsel %vm506, %v507, %v505
    %v509 = vrsqrt.pop %v409
    %v510 = vmul.f32 %v409, %v509
    %vm511 = vcmp.eq.f32.partialorder %v409, inf
    %v512 = vsel %vm511, %v409, %v510
    %vm513 = vcmp.eq.f32.partialorder %v409, 0.0
    %v514 = vand.u32 %v409, 2147483648
    %v515 = vsel %vm513, %v514, %v512
    %v516 = vrsqrt.pop %v410
    %v517 = vmul.f32 %v410, %v516
    %vm518 = vcmp.eq.f32.partialorder %v410, inf
    %v519 = vsel %vm518, %v410, %v517
    %vm520 = vcmp.eq.f32.partialorder %v410, 0.0
    %v521 = vand.u32 %v410, 2147483648
    %v522 = vsel %vm520, %v521, %v519
    %v523 = vld [vmem:[%s94] sm:$0xff]
    %v524 = vld [vmem:[%s94 + $0x8] sm:$0xff]
    %v525 = vld [vmem:[%s94 + $0x10] sm:$0xff]
    %v526 = vld [vmem:[%s94 + $0x18] sm:$0xff]
    %v527 = vld [vmem:[%s94 + $0x20] sm:$0xff]
    %v528 = vld [vmem:[%s94 + $0x28] sm:$0xff]
    %v529 = vld [vmem:[%s94 + $0x30] sm:$0xff]
    %v530 = vld [vmem:[%s94 + $0x38] sm:$0xff]
    %v531 = vld [vmem:[%s94 + $0x40] sm:$0xff]
    %v532 = vld [vmem:[%s94 + $0x48] sm:$0xff]
    %v533 = vld [vmem:[%s94 + $0x50] sm:$0xff]
    %v534 = vld [vmem:[%s94 + $0x58] sm:$0xff]
    %v535 = vld [vmem:[%s94 + $0x60] sm:$0xff]
    %v536 = vld [vmem:[%s94 + $0x68] sm:$0xff]
    %v537 = vld [vmem:[%s94 + $0x70] sm:$0xff]
    %v538 = vld [vmem:[%s94 + $0x78] sm:$0xff]
    %v539 = vld [vmem:[%s100] sm:$0x1]
    %540 = vset.pattern.permute.xlu0 0
    %541 = vperm.xlu0 %540, %v523
    %v542 = vpop.permute.xlu0 %541
    %543 = vset.pattern.permute.xlu0 0
    %544 = vperm.xlu0 %543, %v524
    %v545 = vpop.permute.xlu0 %544
    %546 = vset.pattern.permute.xlu0 0
    %547 = vperm.xlu0 %546, %v525
    %v548 = vpop.permute.xlu0 %547
    %549 = vset.pattern.permute.xlu0 0
    %550 = vperm.xlu0 %549, %v526
    %v551 = vpop.permute.xlu0 %550
    %552 = vset.pattern.permute.xlu0 0
    %553 = vperm.xlu0 %552, %v527
    %v554 = vpop.permute.xlu0 %553
    %555 = vset.pattern.permute.xlu0 0
    %556 = vperm.xlu0 %555, %v528
    %v557 = vpop.permute.xlu0 %556
    %558 = vset.pattern.permute.xlu0 0
    %559 = vperm.xlu0 %558, %v529
    %v560 = vpop.permute.xlu0 %559
    %561 = vset.pattern.permute.xlu0 0
    %562 = vperm.xlu0 %561, %v530
    %v563 = vpop.permute.xlu0 %562
    %564 = vset.pattern.permute.xlu0 0
    %565 = vperm.xlu0 %564, %v531
    %v566 = vpop.permute.xlu0 %565
    %567 = vset.pattern.permute.xlu0 0
    %568 = vperm.xlu0 %567, %v532
    %v569 = vpop.permute.xlu0 %568
    %570 = vset.pattern.permute.xlu0 0
    %571 = vperm.xlu0 %570, %v533
    %v572 = vpop.permute.xlu0 %571
    %573 = vset.pattern.permute.xlu0 0
    %574 = vperm.xlu0 %573, %v534
    %v575 = vpop.permute.xlu0 %574
    %576 = vset.pattern.permute.xlu0 0
    %577 = vperm.xlu0 %576, %v535
    %v578 = vpop.permute.xlu0 %577
    %579 = vset.pattern.permute.xlu0 0
    %580 = vperm.xlu0 %579, %v536
    %v581 = vpop.permute.xlu0 %580
    %582 = vset.pattern.permute.xlu0 0
    %583 = vperm.xlu0 %582, %v537
    %v584 = vpop.permute.xlu0 %583
    %585 = vset.pattern.permute.xlu0 0
    %586 = vperm.xlu0 %585, %v538
    %v587 = vpop.permute.xlu0 %586
    %v588 = vlaneseq
    %v589 = vshrl.u32 %v588, 7
    %v590 = vsub.s32 0, %v589
    %v591 = vrot.slane %v539, %v590
    %vm592 = vcmp.eq.s32.totalorder %v542, %v591
    %vm593 = vcmp.eq.s32.totalorder %v545, %v591
    %vm594 = vcmp.eq.s32.totalorder %v548, %v591
    %vm595 = vcmp.eq.s32.totalorder %v551, %v591
    %vm596 = vcmp.eq.s32.totalorder %v554, %v591
    %vm597 = vcmp.eq.s32.totalorder %v557, %v591
    %vm598 = vcmp.eq.s32.totalorder %v560, %v591
    %vm599 = vcmp.eq.s32.totalorder %v563, %v591
    %vm600 = vcmp.eq.s32.totalorder %v566, %v591
    %vm601 = vcmp.eq.s32.totalorder %v569, %v591
    %vm602 = vcmp.eq.s32.totalorder %v572, %v591
    %vm603 = vcmp.eq.s32.totalorder %v575, %v591
    %vm604 = vcmp.eq.s32.totalorder %v578, %v591
    %vm605 = vcmp.eq.s32.totalorder %v581, %v591
    %vm606 = vcmp.eq.s32.totalorder %v584, %v591
    %vm607 = vcmp.eq.s32.totalorder %v587, %v591
    %v608 = vlaneseq
    %v609 = vshrl.u32 %v608, 7
    %v610 = vadd.s32 %v609, 8
    %v611 = vadd.s32 %v609, 16
    %v612 = vadd.s32 %v609, 24
    %v613 = vadd.s32 %v609, 32
    %v614 = vadd.s32 %v609, 40
    %v615 = vadd.s32 %v609, 48
    %v616 = vadd.s32 %v609, 56
    %v617 = vadd.s32 %v609, 64
    %v618 = vadd.s32 %v609, 72
    %v619 = vadd.s32 %v609, 80
    %v620 = vadd.s32 %v609, 88
    %v621 = vadd.s32 %v609, 96
    %v622 = vadd.s32 %v609, 104
    %v623 = vadd.s32 %v609, 112
    %v624 = vadd.s32 %v609, 120
    %v625 = vlaneseq
    %v626 = vand.u32 %v625, 127
    %vm627 = vcmp.ne.s32.totalorder %v609, %v626
    %vm628 = vcmp.ne.s32.totalorder %v610, %v626
    %vm629 = vcmp.ne.s32.totalorder %v611, %v626
    %vm630 = vcmp.ne.s32.totalorder %v612, %v626
    %vm631 = vcmp.ne.s32.totalorder %v613, %v626
    %vm632 = vcmp.ne.s32.totalorder %v614, %v626
    %vm633 = vcmp.ne.s32.totalorder %v615, %v626
    %vm634 = vcmp.ne.s32.totalorder %v616, %v626
    %vm635 = vcmp.ne.s32.totalorder %v617, %v626
    %vm636 = vcmp.ne.s32.totalorder %v618, %v626
    %vm637 = vcmp.ne.s32.totalorder %v619, %v626
    %vm638 = vcmp.ne.s32.totalorder %v620, %v626
    %vm639 = vcmp.ne.s32.totalorder %v621, %v626
    %vm640 = vcmp.ne.s32.totalorder %v622, %v626
    %vm641 = vcmp.ne.s32.totalorder %v623, %v626
    %vm642 = vcmp.ne.s32.totalorder %v624, %v626
    %p643 = scmp.ne.s32.totalorder %s103, %s104
    %s644 = scalar_select %p643, 1, 0
    %v645 = vstv %s644
    %vm646 = vcmp.eq.s32.totalorder %v645, 1
    %vm647 = vmor %vm627, %vm646
    %vm648 = vmor %vm628, %vm646
    %vm649 = vmor %vm629, %vm646
    %vm650 = vmor %vm630, %vm646
    %vm651 = vmor %vm631, %vm646
    %vm652 = vmor %vm632, %vm646
    %vm653 = vmor %vm633, %vm646
    %vm654 = vmor %vm634, %vm646
    %vm655 = vmor %vm635, %vm646
    %vm656 = vmor %vm636, %vm646
    %vm657 = vmor %vm637, %vm646
    %vm658 = vmor %vm638, %vm646
    %vm659 = vmor %vm639, %vm646
    %vm660 = vmor %vm640, %vm646
    %vm661 = vmor %vm641, %vm646
    %vm662 = vmor %vm642, %vm646
    %vm663 = vmand %vm592, %vm647
    %vm664 = vmand %vm593, %vm648
    %vm665 = vmand %vm594, %vm649
    %vm666 = vmand %vm595, %vm650
    %vm667 = vmand %vm596, %vm651
    %vm668 = vmand %vm597, %vm652
    %vm669 = vmand %vm598, %vm653
    %vm670 = vmand %vm599, %vm654
    %vm671 = vmand %vm600, %vm655
    %vm672 = vmand %vm601, %vm656
    %vm673 = vmand %vm602, %vm657
    %vm674 = vmand %vm603, %vm658
    %vm675 = vmand %vm604, %vm659
    %vm676 = vmand %vm605, %vm660
    %vm677 = vmand %vm606, %vm661
    %vm678 = vmand %vm607, %vm662
    %vm679 = vmxor %vm592, 1
    %vm680 = vmxor %vm593, 1
    %vm681 = vmxor %vm594, 1
    %vm682 = vmxor %vm595, 1
    %vm683 = vmxor %vm596, 1
    %vm684 = vmxor %vm597, 1
    %vm685 = vmxor %vm598, 1
    %vm686 = vmxor %vm599, 1
    %vm687 = vmxor %vm600, 1
    %vm688 = vmxor %vm601, 1
    %vm689 = vmxor %vm602, 1
    %vm690 = vmxor %vm603, 1
    %vm691 = vmxor %vm604, 1
    %vm692 = vmxor %vm605, 1
    %vm693 = vmxor %vm606, 1
    %vm694 = vmxor %vm607, 1
    %s695 = smul.u32 %s103, 128
    %v696 = vstv %s695
    %v697 = vadd.s32 %v696, %v609
    %v698 = vadd.s32 %v696, %v610
    %v699 = vadd.s32 %v696, %v611
    %v700 = vadd.s32 %v696, %v612
    %v701 = vadd.s32 %v696, %v613
    %v702 = vadd.s32 %v696, %v614
    %v703 = vadd.s32 %v696, %v615
    %v704 = vadd.s32 %v696, %v616
    %v705 = vadd.s32 %v696, %v617
    %v706 = vadd.s32 %v696, %v618
    %v707 = vadd.s32 %v696, %v619
    %v708 = vadd.s32 %v696, %v620
    %v709 = vadd.s32 %v696, %v621
    %v710 = vadd.s32 %v696, %v622
    %v711 = vadd.s32 %v696, %v623
    %v712 = vadd.s32 %v696, %v624
    %vm713 = vcmp.lt.s32.totalorder %v697, 16
    %vm714 = vcmp.lt.s32.totalorder %v698, 16
    %vm715 = vcmp.lt.s32.totalorder %v699, 16
    %vm716 = vcmp.lt.s32.totalorder %v700, 16
    %vm717 = vcmp.lt.s32.totalorder %v701, 16
    %vm718 = vcmp.lt.s32.totalorder %v702, 16
    %vm719 = vcmp.lt.s32.totalorder %v703, 16
    %vm720 = vcmp.lt.s32.totalorder %v704, 16
    %vm721 = vcmp.lt.s32.totalorder %v705, 16
    %vm722 = vcmp.lt.s32.totalorder %v706, 16
    %vm723 = vcmp.lt.s32.totalorder %v707, 16
    %vm724 = vcmp.lt.s32.totalorder %v708, 16
    %vm725 = vcmp.lt.s32.totalorder %v709, 16
    %vm726 = vcmp.lt.s32.totalorder %v710, 16
    %vm727 = vcmp.lt.s32.totalorder %v711, 16
    %vm728 = vcmp.lt.s32.totalorder %v712, 16
    %s729 = smul.u32 %s104, 128
    %v730 = vstv %s729
    %v731 = vadd.s32 %v730, %v626
    %vm732 = vcmp.lt.s32.totalorder %v731, 16
    %v733 = vsel %vm713, 1, 0
    %v734 = vsel %vm714, 1, 0
    %v735 = vsel %vm715, 1, 0
    %v736 = vsel %vm716, 1, 0
    %v737 = vsel %vm717, 1, 0
    %v738 = vsel %vm718, 1, 0
    %v739 = vsel %vm719, 1, 0
    %v740 = vsel %vm720, 1, 0
    %v741 = vsel %vm721, 1, 0
    %v742 = vsel %vm722, 1, 0
    %v743 = vsel %vm723, 1, 0
    %v744 = vsel %vm724, 1, 0
    %v745 = vsel %vm725, 1, 0
    %v746 = vsel %vm726, 1, 0
    %v747 = vsel %vm727, 1, 0
    %v748 = vsel %vm728, 1, 0
    %vm749 = vcmp.eq.s32.totalorder %v733, 1
    %vm750 = vcmp.eq.s32.totalorder %v734, 1
    %vm751 = vcmp.eq.s32.totalorder %v735, 1
    %vm752 = vcmp.eq.s32.totalorder %v736, 1
    %vm753 = vcmp.eq.s32.totalorder %v737, 1
    %vm754 = vcmp.eq.s32.totalorder %v738, 1
    %vm755 = vcmp.eq.s32.totalorder %v739, 1
    %vm756 = vcmp.eq.s32.totalorder %v740, 1
    %vm757 = vcmp.eq.s32.totalorder %v741, 1
    %vm758 = vcmp.eq.s32.totalorder %v742, 1
    %vm759 = vcmp.eq.s32.totalorder %v743, 1
    %vm760 = vcmp.eq.s32.totalorder %v744, 1
    %vm761 = vcmp.eq.s32.totalorder %v745, 1
    %vm762 = vcmp.eq.s32.totalorder %v746, 1
    %vm763 = vcmp.eq.s32.totalorder %v747, 1
    %vm764 = vcmp.eq.s32.totalorder %v748, 1
    %v765 = vsel %vm732, 1, 0
    %vm766 = vcmp.eq.s32.totalorder %v765, 1
    %vm767 = vmand %vm749, %vm766
    %vm768 = vmand %vm750, %vm766
    %vm769 = vmand %vm751, %vm766
    %vm770 = vmand %vm752, %vm766
    %vm771 = vmand %vm753, %vm766
    %vm772 = vmand %vm754, %vm766
    %vm773 = vmand %vm755, %vm766
    %vm774 = vmand %vm756, %vm766
    %vm775 = vmand %vm757, %vm766
    %vm776 = vmand %vm758, %vm766
    %vm777 = vmand %vm759, %vm766
    %vm778 = vmand %vm760, %vm766
    %vm779 = vmand %vm761, %vm766
    %vm780 = vmand %vm762, %vm766
    %vm781 = vmand %vm763, %vm766
    %vm782 = vmand %vm764, %vm766
    %vm783 = vmand %vm663, %vm767
    %vm784 = vmand %vm664, %vm768
    %vm785 = vmand %vm665, %vm769
    %vm786 = vmand %vm666, %vm770
    %vm787 = vmand %vm667, %vm771
    %vm788 = vmand %vm668, %vm772
    %vm789 = vmand %vm669, %vm773
    %vm790 = vmand %vm670, %vm774
    %vm791 = vmand %vm671, %vm775
    %vm792 = vmand %vm672, %vm776
    %vm793 = vmand %vm673, %vm777
    %vm794 = vmand %vm674, %vm778
    %vm795 = vmand %vm675, %vm779
    %vm796 = vmand %vm676, %vm780
    %vm797 = vmand %vm677, %vm781
    %vm798 = vmand %vm678, %vm782
    %vm799 = vmand %vm679, %vm767
    %vm800 = vmand %vm680, %vm768
    %vm801 = vmand %vm681, %vm769
    %vm802 = vmand %vm682, %vm770
    %vm803 = vmand %vm683, %vm771
    %vm804 = vmand %vm684, %vm772
    %vm805 = vmand %vm685, %vm773
    %vm806 = vmand %vm686, %vm774
    %vm807 = vmand %vm687, %vm775
    %vm808 = vmand %vm688, %vm776
    %vm809 = vmand %vm689, %vm777
    %vm810 = vmand %vm690, %vm778
    %vm811 = vmand %vm691, %vm779
    %vm812 = vmand %vm692, %vm780
    %vm813 = vmand %vm693, %vm781
    %vm814 = vmand %vm694, %vm782
    %v815 = vsel %vm783, %v417, 0.0
    %v816 = vsel %vm784, %v424, 0.0
    %v817 = vsel %vm785, %v431, 0.0
    %v818 = vsel %vm786, %v438, 0.0
    %v819 = vsel %vm787, %v445, 0.0
    %v820 = vsel %vm788, %v452, 0.0
    %v821 = vsel %vm789, %v459, 0.0
    %v822 = vsel %vm790, %v466, 0.0
    %v823 = vsel %vm791, %v473, 0.0
    %v824 = vsel %vm792, %v480, 0.0
    %v825 = vsel %vm793, %v487, 0.0
    %v826 = vsel %vm794, %v494, 0.0
    %v827 = vsel %vm795, %v501, 0.0
    %v828 = vsel %vm796, %v508, 0.0
    %v829 = vsel %vm797, %v515, 0.0
    %v830 = vsel %vm798, %v522, 0.0
    %v831 = vsub.f32 1.0, %v417
    %v832 = vsub.f32 1.0, %v424
    %v833 = vsub.f32 1.0, %v431
    %v834 = vsub.f32 1.0, %v438
    %v835 = vsub.f32 1.0, %v445
    %v836 = vsub.f32 1.0, %v452
    %v837 = vsub.f32 1.0, %v459
    %v838 = vsub.f32 1.0, %v466
    %v839 = vsub.f32 1.0, %v473
    %v840 = vsub.f32 1.0, %v480
    %v841 = vsub.f32 1.0, %v487
    %v842 = vsub.f32 1.0, %v494
    %v843 = vsub.f32 1.0, %v501
    %v844 = vsub.f32 1.0, %v508
    %v845 = vsub.f32 1.0, %v515
    %v846 = vsub.f32 1.0, %v522
    %v847 = vmax.f32 %v831, 0.0
    %v848 = vmax.f32 %v832, 0.0
    %v849 = vmax.f32 %v833, 0.0
    %v850 = vmax.f32 %v834, 0.0
    %v851 = vmax.f32 %v835, 0.0
    %v852 = vmax.f32 %v836, 0.0
    %v853 = vmax.f32 %v837, 0.0
    %v854 = vmax.f32 %v838, 0.0
    %v855 = vmax.f32 %v839, 0.0
    %v856 = vmax.f32 %v840, 0.0
    %v857 = vmax.f32 %v841, 0.0
    %v858 = vmax.f32 %v842, 0.0
    %v859 = vmax.f32 %v843, 0.0
    %v860 = vmax.f32 %v844, 0.0
    %v861 = vmax.f32 %v845, 0.0
    %v862 = vmax.f32 %v846, 0.0
    %v863 = vsel %vm799, %v847, 0.0
    %v864 = vsel %vm800, %v848, 0.0
    %v865 = vsel %vm801, %v849, 0.0
    %v866 = vsel %vm802, %v850, 0.0
    %v867 = vsel %vm803, %v851, 0.0
    %v868 = vsel %vm804, %v852, 0.0
    %v869 = vsel %vm805, %v853, 0.0
    %v870 = vsel %vm806, %v854, 0.0
    %v871 = vsel %vm807, %v855, 0.0
    %v872 = vsel %vm808, %v856, 0.0
    %v873 = vsel %vm809, %v857, 0.0
    %v874 = vsel %vm810, %v858, 0.0
    %v875 = vsel %vm811, %v859, 0.0
    %v876 = vsel %vm812, %v860, 0.0
    %v877 = vsel %vm813, %v861, 0.0
    %v878 = vsel %vm814, %v862, 0.0
    %vm879 = vcmp.gt.f32.partialorder %v815, 0.0
    %vm880 = vcmp.gt.f32.partialorder %v816, 0.0
    %vm881 = vcmp.gt.f32.partialorder %v817, 0.0
    %vm882 = vcmp.gt.f32.partialorder %v818, 0.0
    %vm883 = vcmp.gt.f32.partialorder %v819, 0.0
    %vm884 = vcmp.gt.f32.partialorder %v820, 0.0
    %vm885 = vcmp.gt.f32.partialorder %v821, 0.0
    %vm886 = vcmp.gt.f32.partialorder %v822, 0.0
    %vm887 = vcmp.gt.f32.partialorder %v823, 0.0
    %vm888 = vcmp.gt.f32.partialorder %v824, 0.0
    %vm889 = vcmp.gt.f32.partialorder %v825, 0.0
    %vm890 = vcmp.gt.f32.partialorder %v826, 0.0
    %vm891 = vcmp.gt.f32.partialorder %v827, 0.0
    %vm892 = vcmp.gt.f32.partialorder %v828, 0.0
    %vm893 = vcmp.gt.f32.partialorder %v829, 0.0
    %vm894 = vcmp.gt.f32.partialorder %v830, 0.0
    %v895 = vsel %vm879, 1, 0
    %v896 = vsel %vm880, 1, 0
    %v897 = vsel %vm881, 1, 0
    %v898 = vsel %vm882, 1, 0
    %v899 = vsel %vm883, 1, 0
    %v900 = vsel %vm884, 1, 0
    %v901 = vsel %vm885, 1, 0
    %v902 = vsel %vm886, 1, 0
    %v903 = vsel %vm887, 1, 0
    %v904 = vsel %vm888, 1, 0
    %v905 = vsel %vm889, 1, 0
    %v906 = vsel %vm890, 1, 0
    %v907 = vsel %vm891, 1, 0
    %v908 = vsel %vm892, 1, 0
    %v909 = vsel %vm893, 1, 0
    %v910 = vsel %vm894, 1, 0
    %v911 = vcvt.s32.f32 %v895
    %v912 = vcvt.s32.f32 %v896
    %v913 = vcvt.s32.f32 %v897
    %v914 = vcvt.s32.f32 %v898
    %v915 = vcvt.s32.f32 %v899
    %v916 = vcvt.s32.f32 %v900
    %v917 = vcvt.s32.f32 %v901
    %v918 = vcvt.s32.f32 %v902
    %v919 = vcvt.s32.f32 %v903
    %v920 = vcvt.s32.f32 %v904
    %v921 = vcvt.s32.f32 %v905
    %v922 = vcvt.s32.f32 %v906
    %v923 = vcvt.s32.f32 %v907
    %v924 = vcvt.s32.f32 %v908
    %v925 = vcvt.s32.f32 %v909
    %v926 = vcvt.s32.f32 %v910
    %vm927 = vcmp.gt.f32.partialorder %v863, 0.0
    %vm928 = vcmp.gt.f32.partialorder %v864, 0.0
    %vm929 = vcmp.gt.f32.partialorder %v865, 0.0
    %vm930 = vcmp.gt.f32.partialorder %v866, 0.0
    %vm931 = vcmp.gt.f32.partialorder %v867, 0.0
    %vm932 = vcmp.gt.f32.partialorder %v868, 0.0
    %vm933 = vcmp.gt.f32.partialorder %v869, 0.0
    %vm934 = vcmp.gt.f32.partialorder %v870, 0.0
    %vm935 = vcmp.gt.f32.partialorder %v871, 0.0
    %vm936 = vcmp.gt.f32.partialorder %v872, 0.0
    %vm937 = vcmp.gt.f32.partialorder %v873, 0.0
    %vm938 = vcmp.gt.f32.partialorder %v874, 0.0
    %vm939 = vcmp.gt.f32.partialorder %v875, 0.0
    %vm940 = vcmp.gt.f32.partialorder %v876, 0.0
    %vm941 = vcmp.gt.f32.partialorder %v877, 0.0
    %vm942 = vcmp.gt.f32.partialorder %v878, 0.0
    %v943 = vsel %vm927, 1, 0
    %v944 = vsel %vm928, 1, 0
    %v945 = vsel %vm929, 1, 0
    %v946 = vsel %vm930, 1, 0
    %v947 = vsel %vm931, 1, 0
    %v948 = vsel %vm932, 1, 0
    %v949 = vsel %vm933, 1, 0
    %v950 = vsel %vm934, 1, 0
    %v951 = vsel %vm935, 1, 0
    %v952 = vsel %vm936, 1, 0
    %v953 = vsel %vm937, 1, 0
    %v954 = vsel %vm938, 1, 0
    %v955 = vsel %vm939, 1, 0
    %v956 = vsel %vm940, 1, 0
    %v957 = vsel %vm941, 1, 0
    %v958 = vsel %vm942, 1, 0
    %v959 = vcvt.s32.f32 %v943
    %v960 = vcvt.s32.f32 %v944
    %v961 = vcvt.s32.f32 %v945
    %v962 = vcvt.s32.f32 %v946
    %v963 = vcvt.s32.f32 %v947
    %v964 = vcvt.s32.f32 %v948
    %v965 = vcvt.s32.f32 %v949
    %v966 = vcvt.s32.f32 %v950
    %v967 = vcvt.s32.f32 %v951
    %v968 = vcvt.s32.f32 %v952
    %v969 = vcvt.s32.f32 %v953
    %v970 = vcvt.s32.f32 %v954
    %v971 = vcvt.s32.f32 %v955
    %v972 = vcvt.s32.f32 %v956
    %v973 = vcvt.s32.f32 %v957
    %v974 = vcvt.s32.f32 %v958
    %p975 = scmp.eq.s32.totalorder %s103, %s104
    %s976 = scalar_select %p975, 1.0, 2.0
    %v977 = vadd.f32 %v815, %v816
    %v978 = vadd.f32 %v977, %v817
    %v979 = vadd.f32 %v978, %v818
    %v980 = vadd.f32 %v979, %v819
    %v981 = vadd.f32 %v980, %v820
    %v982 = vadd.f32 %v981, %v821
    %v983 = vadd.f32 %v982, %v822
    %v984 = vadd.f32 %v983, %v823
    %v985 = vadd.f32 %v984, %v824
    %v986 = vadd.f32 %v985, %v825
    %v987 = vadd.f32 %v986, %v826
    %v988 = vadd.f32 %v987, %v827
    %v989 = vadd.f32 %v988, %v828
    %v990 = vadd.f32 %v989, %v829
    %v991 = vadd.f32 %v990, %v830
    %v992 = vstv %s976
    %v993 = vmul.f32 %v992, %v991
    %994 = vst [vmem:[#allocation5] sm:$0xff] %v993
    %v995 = vadd.f32 %v911, %v912
    %v996 = vadd.f32 %v995, %v913
    %v997 = vadd.f32 %v996, %v914
    %v998 = vadd.f32 %v997, %v915
    %v999 = vadd.f32 %v998, %v916
    %v1000 = vadd.f32 %v999, %v917
    %v1001 = vadd.f32 %v1000, %v918
    %v1002 = vadd.f32 %v1001, %v919
    %v1003 = vadd.f32 %v1002, %v920
    %v1004 = vadd.f32 %v1003, %v921
    %v1005 = vadd.f32 %v1004, %v922
    %v1006 = vadd.f32 %v1005, %v923
    %v1007 = vadd.f32 %v1006, %v924
    %v1008 = vadd.f32 %v1007, %v925
    %v1009 = vadd.f32 %v1008, %v926
    %v1010 = vmul.f32 %v992, %v1009
    %s1011 = scalar_lea.vmem [#allocation5], 8
    %1012 = vst [vmem:[%s1011] sm:$0xff] %v1010
    %v1013 = vadd.f32 %v863, %v864
    %v1014 = vadd.f32 %v1013, %v865
    %v1015 = vadd.f32 %v1014, %v866
    %v1016 = vadd.f32 %v1015, %v867
    %v1017 = vadd.f32 %v1016, %v868
    %v1018 = vadd.f32 %v1017, %v869
    %v1019 = vadd.f32 %v1018, %v870
    %v1020 = vadd.f32 %v1019, %v871
    %v1021 = vadd.f32 %v1020, %v872
    %v1022 = vadd.f32 %v1021, %v873
    %v1023 = vadd.f32 %v1022, %v874
    %v1024 = vadd.f32 %v1023, %v875
    %v1025 = vadd.f32 %v1024, %v876
    %v1026 = vadd.f32 %v1025, %v877
    %v1027 = vadd.f32 %v1026, %v878
    %v1028 = vmul.f32 %v992, %v1027
    %s1029 = scalar_lea.vmem [#allocation5], 16
    %1030 = vst [vmem:[%s1029] sm:$0xff] %v1028
    %v1031 = vadd.f32 %v959, %v960
    %v1032 = vadd.f32 %v1031, %v961
    %v1033 = vadd.f32 %v1032, %v962
    %v1034 = vadd.f32 %v1033, %v963
    %v1035 = vadd.f32 %v1034, %v964
    %v1036 = vadd.f32 %v1035, %v965
    %v1037 = vadd.f32 %v1036, %v966
    %v1038 = vadd.f32 %v1037, %v967
    %v1039 = vadd.f32 %v1038, %v968
    %v1040 = vadd.f32 %v1039, %v969
    %v1041 = vadd.f32 %v1040, %v970
    %v1042 = vadd.f32 %v1041, %v971
    %v1043 = vadd.f32 %v1042, %v972
    %v1044 = vadd.f32 %v1043, %v973
    %v1045 = vadd.f32 %v1044, %v974
    %v1046 = vmul.f32 %v992, %v1045
    %s1047 = scalar_lea.vmem [#allocation5], 24
    %1048 = vst [vmem:[%s1047] sm:$0xff] %v1046
    // Predicated region
    $region18: #{tpu_custom_call.1} parent=1 // pred_check
      _
    $region19: #{tpu_custom_call.1} parent=1 // pred_check_branch
      %1050 = sbr.rel (0) target = $region21
    $region20: #{tpu_custom_call.1} parent=1 // pred_region
      %s1052 = ssub.s32 512, 512
      %1053 = vsyncadd [#allocation6], %s1052
      %s1054 = sshll.u32 [#allocation5], 4
      %s1055 = int_to_ptr.vmem [resolvable:$true] %s1054
      %1060 = dma.vmem_to_hbm [thread:$0]  %s1055, 512, %s6, [#allocation6], 128, 128, 8
    $region21: #{tpu_custom_call.1} parent=1 // pred_fallthru
      _
    // Predicated region
    $region22: #{tpu_custom_call.1} parent=1 // pred_check
      _
    $region23: #{tpu_custom_call.1} parent=1 // pred_check_branch
      %1062 = sbr.rel (0) target = $region25
    $region24: #{tpu_custom_call.1} parent=1 // pred_region
      %1063 = dma.done [#allocation6], 512
    $region25: #{tpu_custom_call.1} parent=1 // pred_fallthru
      _
    %1064 = vsyncpa [#allocation6], 1

</llo_original>
